<compile_context>
chip_gen: v6e
topology: v6e:2x2x1
jax: 0.10.0
libtpu: 0.0.40
codegen_flags: <defaults>
</compile_context>

<pallas_src>
import functools

import jax
import jax.numpy as jnp
from jax.experimental import pallas as pl
from jax.experimental.pallas import tpu as pltpu


_LANE = 128
_SUBLANE = 8
_MIN_PIPELINE_BYTES = 1 * 1024 * 1024    # below this, a single block is fine
_MIN_BLOCKS = 8                          # target grid depth once we pipeline
_MAX_SLAB_BYTES = 16 * 1024 * 1024       # hard cap for one aligned slab


@functools.lru_cache(maxsize=None)
def _budgets():
    """(per-tile byte target, vmem_limit_bytes), derived from physical VMEM."""
    vmem = 64 * 1024 * 1024              # conservative default (v7x per-TC)
    try:
        info = pltpu.get_tpu_info()
        vmem = int(getattr(info, "vmem_capacity_bytes", vmem)) or vmem
    except Exception:
        pass
    tile_bytes = max(512 * 1024, min(4 * 1024 * 1024, vmem // 32))
    vmem_limit = min(48 * 1024 * 1024, (vmem * 3) // 5)
    return tile_bytes, vmem_limit


def _sublane_align(dtype):
    # 8 rows for 32-bit, 16 for bf16/fp16, 32 for int8/fp8 (sublane packing).
    item = jnp.dtype(dtype).itemsize
    return _SUBLANE * max(1, 4 // item)


def _pick_tile(total, bytes_per_unit, align):
    """Pick (tile, n_blocks) along an axis of `total` units of
    `bytes_per_unit` bytes each.  Tiles are `align`-aligned unless a single
    full-extent block is used (tiny inputs only).  Forces >= _MIN_BLOCKS
    blocks once the axis is big enough to benefit from pipelining / megacore
    sharding; the VMEM byte budget still caps the tile size."""
    tile_bytes, _ = _budgets()
    bytes_per_unit = max(bytes_per_unit, 1)
    min_slab = align * bytes_per_unit
    if min_slab > _MAX_SLAB_BYTES:
        # TODO(synk): extremely wide normalized dim needs a two-stage C-split
        # reduction; refuse loudly rather than silently blowing VMEM.
        raise NotImplementedError(
            f"minimum slab ({min_slab} B) exceeds the VMEM tile budget")
    total_bytes = total * bytes_per_unit
    if total <= align or total_bytes <= _MIN_PIPELINE_BYTES:
        return total, 1                               # tiny: one full block
    budget_units = max(align, (tile_bytes // bytes_per_unit) // align * align)
    pipe_units = max(align, (total // _MIN_BLOCKS) // align * align)
    tile = min(budget_units, pipe_units)
    return tile, pl.cdiv(total, tile)


# ---------------------------------------------------------------------------
# Kernel bodies
# ---------------------------------------------------------------------------
def _ln_rows_kernel(x_ref, w_ref, b_ref, o_ref, *, eps):
    # x: (tile_r, C) -- normalize over the lane (last) dim.  w/b: (1, C).
    x = x_ref[...].astype(jnp.float32)
    mean = jnp.mean(x, axis=-1, keepdims=True)
    var = jnp.mean(jnp.square(x - mean), axis=-1, keepdims=True)   # biased
    inv = jax.lax.rsqrt(var + eps)
    w = w_ref[...].astype(jnp.float32)
    b = b_ref[...].astype(jnp.float32)
    o_ref[...] = ((x - mean) * inv * w + b).astype(o_ref.dtype)


def _ln_cfirst_kernel(x_ref, w_ref, b_ref, o_ref, *, eps):
    # x: (1, C, tile_w) -- channels on sublanes, W on lanes; reduce over C.
    # w/b: (C, 1).
    x = x_ref[0].astype(jnp.float32)                   # (C, tile_w)
    mean = jnp.mean(x, axis=0, keepdims=True)
    var = jnp.mean(jnp.square(x - mean), axis=0, keepdims=True)    # biased
    inv = jax.lax.rsqrt(var + eps)
    w = w_ref[...].astype(jnp.float32)
    b = b_ref[...].astype(jnp.float32)
    o_ref[0] = ((x - mean) * inv * w + b).astype(o_ref.dtype)


# ---------------------------------------------------------------------------
# channels_last: (..., C), normalize over the last dim  (F.layer_norm)
# ---------------------------------------------------------------------------
def layer_norm_channels_last(x, weight, bias, eps=1e-6):
    orig_shape = x.shape
    C = orig_shape[-1]
    R = 1
    for d in orig_shape[:-1]:
        R *= d
    x2 = x.reshape(R, C)                               # free reshape, no copy
    itemsize = jnp.dtype(x.dtype).itemsize
    tile_r, grid_r = _pick_tile(R, C * itemsize, _sublane_align(x.dtype))
    _, vmem_limit = _budgets()

    out = pl.pallas_call(
        functools.partial(_ln_rows_kernel, eps=eps),
        out_shape=jax.ShapeDtypeStruct((R, C), x.dtype),
        grid=(grid_r,),
        in_specs=[
            pl.BlockSpec((tile_r, C), lambda i: (i, 0)),
            pl.BlockSpec((1, C), lambda i: (0, 0)),
            pl.BlockSpec((1, C), lambda i: (0, 0)),
        ],
        out_specs=pl.BlockSpec((tile_r, C), lambda i: (i, 0)),
        compiler_params=pltpu.CompilerParams(
            dimension_semantics=("parallel",),
            vmem_limit_bytes=vmem_limit),
    )(x2, weight.reshape(1, C), bias.reshape(1, C))
    return out.reshape(orig_shape)


# ---------------------------------------------------------------------------
# channels_first: (B, C, W), normalize over C (dim 1) -- native layout
# ---------------------------------------------------------------------------
def layer_norm_channels_first(x, weight, bias, eps=1e-6):
    B, C, W = x.shape
    itemsize = jnp.dtype(x.dtype).itemsize
    tile_w, grid_w = _pick_tile(W, C * itemsize, _LANE)
    _, vmem_limit = _budgets()

    return pl.pallas_call(
        functools.partial(_ln_cfirst_kernel, eps=eps),
        out_shape=jax.ShapeDtypeStruct((B, C, W), x.dtype),
        grid=(B, grid_w),
        in_specs=[
            pl.BlockSpec((1, C, tile_w), lambda b, j: (b, 0, j)),
            pl.BlockSpec((C, 1), lambda b, j: (0, 0)),
            pl.BlockSpec((C, 1), lambda b, j: (0, 0)),
        ],
        out_specs=pl.BlockSpec((1, C, tile_w), lambda b, j: (b, 0, j)),
        compiler_params=pltpu.CompilerParams(
            dimension_semantics=("parallel", "parallel"),
            vmem_limit_bytes=vmem_limit),
    )(x, weight.reshape(C, 1), bias.reshape(C, 1))


# ---------------------------------------------------------------------------
# Pure-JAX references for correctness checking
# ---------------------------------------------------------------------------
def _ref_last(x, w, b, eps):
    x32 = x.astype(jnp.float32)
    u = jnp.mean(x32, axis=-1, keepdims=True)
    s = jnp.mean((x32 - u) ** 2, axis=-1, keepdims=True)
    return ((x32 - u) / jnp.sqrt(s + eps) * w + b).astype(x.dtype)


def _ref_first(x, w, b, eps):
    x32 = x.astype(jnp.float32)
    u = jnp.mean(x32, axis=1, keepdims=True)
    s = jnp.mean((x32 - u) ** 2, axis=1, keepdims=True)
    y = (x32 - u) / jnp.sqrt(s + eps)
    return (w[None, :, None] * y + b[None, :, None]).astype(x.dtype)


if __name__ == "__main__":
    key = jax.random.PRNGKey(0)
    eps = 1e-6  # matches the module's default (torch.nn.LayerNorm default is 1e-5)

    def params(C):
        w = jnp.ones((C,), jnp.float32) + 0.01 * jnp.arange(C, dtype=jnp.float32)
        b = 0.001 * jnp.arange(C, dtype=jnp.float32)
        return w, b

    k1, k2, k3, k4 = jax.random.split(key, 4)

    # Small shapes matching the module usage (no transposes, masked-lane path).
    B, W, C = 2, 16, 32
    w_s, b_s = params(C)
    x_last = jax.random.normal(k1, (B, W, C), dtype=jnp.float32)    # channels_last
    x_first = jax.random.normal(k2, (B, C, W), dtype=jnp.float32)   # channels_first

    y_last = jax.block_until_ready(layer_norm_channels_last(x_last, w_s, b_s, eps))
    y_first = jax.block_until_ready(layer_norm_channels_first(x_first, w_s, b_s, eps))
    assert jnp.allclose(y_last, _ref_last(x_last, w_s, b_s, eps),
                        atol=1e-5, rtol=1e-5), "channels_last (small) mismatch"
    assert jnp.allclose(y_first, _ref_first(x_first, w_s, b_s, eps),
                        atol=1e-5, rtol=1e-5), "channels_first (small) mismatch"

    # Medium shapes: exercise the multi-block pipelined paths (>= 8 grid steps,
    # partial edge tiles, megacore-shardable grids).
    w_m, b_m = params(512)
    x_last_big = jax.random.normal(k3, (4, 500, 512), dtype=jnp.float32)
    w_f, b_f = params(64)
    x_first_big = jax.random.normal(k4, (2, 64, 8192), dtype=jnp.float32)

    y_last_big = jax.block_until_ready(
        layer_norm_channels_last(x_last_big, w_m, b_m, eps))
    y_first_big = jax.block_until_ready(
        layer_norm_channels_first(x_first_big, w_f, b_f, eps))
    assert jnp.allclose(y_last_big, _ref_last(x_last_big, w_m, b_m, eps),
                        atol=1e-5, rtol=1e-5), "channels_last (tiled) mismatch"
    assert jnp.allclose(y_first_big, _ref_first(x_first_big, w_f, b_f, eps),
                        atol=1e-5, rtol=1e-5), "channels_first (tiled) mismatch"

    print("KERNEL_OK")
</pallas_src>

<mosaic_0001>
module attributes {stable_mosaic.version = 11 : i64} {
  func.func @_ln_rows_kernel(%arg0: i32, %arg1: memref<32x32xf32, #tpu.memory_space<vmem>>, %arg2: memref<1x32xf32, #tpu.memory_space<vmem>>, %arg3: memref<1x32xf32, #tpu.memory_space<vmem>>, %arg4: memref<32x32xf32, #tpu.memory_space<vmem>>) attributes {dimension_semantics = [#tpu.dimension_semantics<parallel>], iteration_bounds = array<i64: 1>, scalar_prefetch = 0 : i64, scratch_operands = 0 : i64, tpu.core_type = #tpu.core_type<tc>, window_params = [{transform_indices = @transform_0, window_bounds = array<i64: 32, 32>}, {pipeline_mode = #tpu.pipeline_mode<synchronous>, transform_indices = @transform_1, window_bounds = array<i64: 1, 32>}, {pipeline_mode = #tpu.pipeline_mode<synchronous>, transform_indices = @transform_2, window_bounds = array<i64: 1, 32>}, {transform_indices = @transform_3, window_bounds = array<i64: 32, 32>}]} {
    %c0 = arith.constant 0 : index
    %c0_0 = arith.constant 0 : index
    %0 = vector.load %arg1[%c0, %c0_0] : memref<32x32xf32, #tpu.memory_space<vmem>>, vector<32x32xf32>
    %cst = arith.constant dense<0.000000e+00> : vector<32xf32>
    %1 = vector.multi_reduction <add>, %0, %cst [1] : vector<32x32xf32> to vector<32xf32>
    %2 = vector.shape_cast %1 : vector<32xf32> to vector<32x1xf32>
    %cst_1 = arith.constant 3.200000e+01 : f32
    %3 = vector.broadcast %cst_1 : f32 to vector<32x1xf32>
    %4 = arith.divf %2, %3 : vector<32x1xf32>
    %5 = vector.broadcast %4 : vector<32x1xf32> to vector<32x32xf32>
    %6 = arith.subf %0, %5 : vector<32x32xf32>
    %7 = arith.mulf %6, %6 : vector<32x32xf32>
    %cst_2 = arith.constant dense<0.000000e+00> : vector<32xf32>
    %8 = vector.multi_reduction <add>, %7, %cst_2 [1] : vector<32x32xf32> to vector<32xf32>
    %9 = vector.shape_cast %8 : vector<32xf32> to vector<32x1xf32>
    %cst_3 = arith.constant 3.200000e+01 : f32
    %10 = vector.broadcast %cst_3 : f32 to vector<32x1xf32>
    %11 = arith.divf %9, %10 : vector<32x1xf32>
    %cst_4 = arith.constant 9.99999997E-7 : f32
    %12 = vector.broadcast %cst_4 : f32 to vector<32x1xf32>
    %13 = arith.addf %11, %12 : vector<32x1xf32>
    %14 = math.rsqrt %13 : vector<32x1xf32>
    %c0_5 = arith.constant 0 : index
    %c0_6 = arith.constant 0 : index
    %15 = vector.load %arg2[%c0_5, %c0_6] : memref<1x32xf32, #tpu.memory_space<vmem>>, vector<1x32xf32>
    %c0_7 = arith.constant 0 : index
    %c0_8 = arith.constant 0 : index
    %16 = vector.load %arg3[%c0_7, %c0_8] : memref<1x32xf32, #tpu.memory_space<vmem>>, vector<1x32xf32>
    %17 = vector.broadcast %4 : vector<32x1xf32> to vector<32x32xf32>
    %18 = arith.subf %0, %17 : vector<32x32xf32>
    %19 = vector.broadcast %14 : vector<32x1xf32> to vector<32x32xf32>
    %20 = arith.mulf %18, %19 : vector<32x32xf32>
    %21 = vector.broadcast %15 : vector<1x32xf32> to vector<32x32xf32>
    %22 = arith.mulf %20, %21 : vector<32x32xf32>
    %23 = vector.broadcast %16 : vector<1x32xf32> to vector<32x32xf32>
    %24 = arith.addf %22, %23 : vector<32x32xf32>
    %c0_9 = arith.constant 0 : index
    %c0_10 = arith.constant 0 : index
    %25 = vector.load %arg4[%c0_9, %c0_10] : memref<32x32xf32, #tpu.memory_space<vmem>>, vector<32x32xf32>
    tpu.vector_store %arg4[%c0_9, %c0_10], %24 {strides = array<i32>} : memref<32x32xf32, #tpu.memory_space<vmem>>, vector<32x32xf32>,
    return
  }
  func.func @transform_0(%arg0: i32) -> (i32, i32) {
    %c0_i32 = arith.constant 0 : i32
    %c0_i32_0 = arith.constant 0 : i32
    return %arg0, %c0_i32 : i32, i32
  }
  func.func @transform_1(%arg0: i32) -> (i32, i32) {
    %c0_i32 = arith.constant 0 : i32
    %c0_i32_0 = arith.constant 0 : i32
    %c0_i32_1 = arith.constant 0 : i32
    return %c0_i32, %c0_i32_0 : i32, i32
  }
  func.func @transform_2(%arg0: i32) -> (i32, i32) {
    %c0_i32 = arith.constant 0 : i32
    %c0_i32_0 = arith.constant 0 : i32
    %c0_i32_1 = arith.constant 0 : i32
    return %c0_i32, %c0_i32_0 : i32, i32
  }
  func.func @transform_3(%arg0: i32) -> (i32, i32) {
    %c0_i32 = arith.constant 0 : i32
    %c0_i32_0 = arith.constant 0 : i32
    return %arg0, %c0_i32 : i32, i32
  }
}

</mosaic_0001>

<llo_original>
// kernel: tpu_custom_call.1
$region0: #{tpu_custom_call.1}
  #allocation0 [shape = 'u32[]', space=smem, size = 0x4, offset = 0x4, fixed_abs, tag = 'smem constant byte address 0x4 - core index']
  #allocation1 [shape = 'u32[144,128]{1,0:T(1,128)}', space=vmem, size = 0x12000, scoped, tag = 'internal scratch']
  %s0 = inlined_call_operand.hbm [shape: f32[32,32], index: 0, kind: input, shape index: {}]
  %s1 = inlined_call_operand.vmem [shape: f32[1,32], index: 1, kind: input, shape index: {}]
  %s2 = inlined_call_operand.vmem [shape: f32[1,32], index: 2, kind: input, shape index: {}]
  %s3 = inlined_call_operand.hbm [shape: f32[32,32], index: 3, kind: output, shape index: {}]
  %s4 = sld [smem:[#allocation0]]
  $region26: #{tpu_custom_call.1} parent=0
    _
  %s6 = ssub.s32 1, %s4
  %s7 = scalar_select 0, %s6, %s4
  $region1: #{tpu_custom_call.1} parent=0
    #allocation2 [shape = 'u8[16384]{0}', space=vmem, size = 0x4000, scoped, tag = 'input window, operand 0, single buffered']
    #allocation3 [shape = 's32[1]{0}', space=sflag, size = 0x4, scoped, tag = 'scoped memory for tpu_custom_call.1']
    #allocation4 [shape = 's32[1]{0}', space=sflag, size = 0x4, scoped, tag = 'scoped memory for tpu_custom_call.1']
    #allocation5 [shape = 'u8[16384]{0}', space=vmem, size = 0x4000, scoped, tag = 'output window, operand 0, single buffered']
    %8 = vsyncpa [#allocation3], 0
    %9 = vsyncpa [#allocation4], 0
    // Predicated region
    $region2: #{tpu_custom_call.1} parent=1 // pred_check
      _
    $region3: #{tpu_custom_call.1} parent=1 // pred_check_branch
      %11 = sbr.rel (0) target = $region5
    $region4: #{tpu_custom_call.1} parent=1 // pred_region
      %s13 = ssub.s32 512, 512
      %14 = vsyncadd [#allocation3], %s13
      %s15 = sshll.u32 [#allocation2], 4
      %s16 = int_to_ptr.vmem [resolvable:$true] %s15
      %21 = dma.hbm_to_vmem [thread:$0]  %s0, 512, %s16, [#allocation3], 128, 128, 8
    $region5: #{tpu_custom_call.1} parent=1 // pred_fallthru
      _
    // Predicated region
    $region6: #{tpu_custom_call.1} parent=1 // pred_check
      _
    $region7: #{tpu_custom_call.1} parent=1 // pred_check_branch
      %23 = sbr.rel (0) target = $region9
    $region8: #{tpu_custom_call.1} parent=1 // pred_region
      _
    $region9: #{tpu_custom_call.1} parent=1 // pred_fallthru
      _
    // Predicated region
    $region10: #{tpu_custom_call.1} parent=1 // pred_check
      _
    $region11: #{tpu_custom_call.1} parent=1 // pred_check_branch
      %25 = sbr.rel (0) target = $region13
    $region12: #{tpu_custom_call.1} parent=1 // pred_region
      _
    $region13: #{tpu_custom_call.1} parent=1 // pred_fallthru
      _
    // Predicated region
    $region14: #{tpu_custom_call.1} parent=1 // pred_check
      _
    $region15: #{tpu_custom_call.1} parent=1 // pred_check_branch
      %27 = sbr.rel (0) target = $region17
    $region16: #{tpu_custom_call.1} parent=1 // pred_region
      %28 = dma.done [#allocation3], 512
    $region17: #{tpu_custom_call.1} parent=1 // pred_fallthru
      _
    %v29 = vld [vmem:[#allocation2] sm:$0xff]
    %v30 = vld [vmem:[#allocation2 + $0x8] sm:$0xff]
    %v31 = vld [vmem:[#allocation2 + $0x10] sm:$0xff]
    %v32 = vld [vmem:[#allocation2 + $0x18] sm:$0xff]
    %vm33 = vcmask 261120
    %v34 = vsel %vm33, %v29, 0.0
    %35 = vadd.xlane.f32.xlu0 %v34
    %v36 = vpop.xlane.xlu0 %35
    %v37 = vsel %vm33, %v30, 0.0
    %38 = vadd.xlane.f32.xlu0 %v37
    %v39 = vpop.xlane.xlu0 %38
    %v40 = vsel %vm33, %v31, 0.0
    %41 = vadd.xlane.f32.xlu0 %v40
    %v42 = vpop.xlane.xlu0 %41
    %v43 = vsel %vm33, %v32, 0.0
    %44 = vadd.xlane.f32.xlu0 %v43
    %v45 = vpop.xlane.xlu0 %44
    %v46 = vrcp.pop 32.0
    %v47 = vmul.f32 %v36, %v46
    %v48 = vmul.f32 %v39, %v46
    %v49 = vmul.f32 %v42, %v46
    %v50 = vmul.f32 %v45, %v46
    %v51 = vsub.f32 %v29, %v47
    %v52 = vsub.f32 %v30, %v48
    %v53 = vsub.f32 %v31, %v49
    %v54 = vsub.f32 %v32, %v50
    %v55 = vmul.f32 %v51, %v51
    %v56 = vmul.f32 %v52, %v52
    %v57 = vmul.f32 %v53, %v53
    %v58 = vmul.f32 %v54, %v54
    %v59 = vsel %vm33, %v55, 0.0
    %60 = vadd.xlane.f32.xlu0 %v59
    %v61 = vpop.xlane.xlu0 %60
    %v62 = vsel %vm33, %v56, 0.0
    %63 = vadd.xlane.f32.xlu0 %v62
    %v64 = vpop.xlane.xlu0 %63
    %v65 = vsel %vm33, %v57, 0.0
    %66 = vadd.xlane.f32.xlu0 %v65
    %v67 = vpop.xlane.xlu0 %66
    %v68 = vsel %vm33, %v58, 0.0
    %69 = vadd.xlane.f32.xlu0 %v68
    %v70 = vpop.xlane.xlu0 %69
    %v71 = vmul.f32 %v61, %v46
    %v72 = vmul.f32 %v64, %v46
    %v73 = vmul.f32 %v67, %v46
    %v74 = vmul.f32 %v70, %v46
    %v75 = vadd.f32 %v71, 1e-06
    %v76 = vadd.f32 %v72, 1e-06
    %v77 = vadd.f32 %v73, 1e-06
    %v78 = vadd.f32 %v74, 1e-06
    %v79 = vrsqrt.pop %v75
    %v80 = vrsqrt.pop %v76
    %v81 = vrsqrt.pop %v77
    %v82 = vrsqrt.pop %v78
    %v83 = vld [vmem:[%s1] sm:$0x1]
    %v84 = vld [vmem:[%s2] sm:$0x1]
    %v85 = vmul.f32 %v51, %v79
    %v86 = vmul.f32 %v52, %v80
    %v87 = vmul.f32 %v53, %v81
    %v88 = vmul.f32 %v54, %v82
    %v90 = vlaneseq
    %v91 = vshrl.u32 %v90, 7
    %v92 = vsub.s32 0, %v91
    %v93 = vrot.slane %v83, %v92
    %v95 = vmul.f32 %v85, %v93
    %v96 = vmul.f32 %v86, %v93
    %v97 = vmul.f32 %v87, %v93
    %v98 = vmul.f32 %v88, %v93
    %v100 = vlaneseq
    %v101 = vshrl.u32 %v100, 7
    %v102 = vsub.s32 0, %v101
    %v103 = vrot.slane %v84, %v102
    %v105 = vadd.f32 %v95, %v103
    %v106 = vadd.f32 %v96, %v103
    %v107 = vadd.f32 %v97, %v103
    %v108 = vadd.f32 %v98, %v103
    %109 = vst.msk [vmem:[#allocation5] sm:$0xff] %vm33, %v105
    %110 = vst.msk [vmem:[#allocation5 + $0x8] sm:$0xff] %vm33, %v106
    %111 = vst.msk [vmem:[#allocation5 + $0x10] sm:$0xff] %vm33, %v107
    %112 = vst.msk [vmem:[#allocation5 + $0x18] sm:$0xff] %vm33, %v108
    // Predicated region
    $region18: #{tpu_custom_call.1} parent=1 // pred_check
      _
    $region19: #{tpu_custom_call.1} parent=1 // pred_check_branch
      %114 = sbr.rel (0) target = $region21
    $region20: #{tpu_custom_call.1} parent=1 // pred_region
      %s116 = ssub.s32 512, 512
      %117 = vsyncadd [#allocation4], %s116
      %s118 = sshll.u32 [#allocation5], 4
      %s119 = int_to_ptr.vmem [resolvable:$true] %s118
      %124 = dma.vmem_to_hbm [thread:$0]  %s119, 512, %s3, [#allocation4], 128, 128, 8
    $region21: #{tpu_custom_call.1} parent=1 // pred_fallthru
      _
    // Predicated region
    $region22: #{tpu_custom_call.1} parent=1 // pred_check
      _
    $region23: #{tpu_custom_call.1} parent=1 // pred_check_branch
      %126 = sbr.rel (0) target = $region25
    $region24: #{tpu_custom_call.1} parent=1 // pred_region
      %127 = dma.done [#allocation4], 512
    $region25: #{tpu_custom_call.1} parent=1 // pred_fallthru
      _
    %128 = vsyncpa [#allocation3], 1
    %129 = vsyncpa [#allocation4], 1

</llo_original>
